<compile_context>
chip_gen: v7x
topology: tpu7x:2x2x1
jax: 0.10.0
libtpu: 0.0.40
codegen_flags: <defaults>
</compile_context>

<pallas_src>
import jax
import jax.numpy as jnp
from jax.experimental import pallas as pl
from jax.experimental.pallas import tpu as pltpu


def _round_up(n, m):
    return ((n + m - 1) // m) * m


def _fused_heads_kernel(gid_ref, x_ref, w_ref, b_ref, o_ref):
    # gid_ref: (num_tiles,) int32 SMEM (scalar prefetch; only used by index_maps)
    # x_ref:   (TILE_M, K_pad) bf16
    # w_ref:   (K_pad, O_pad)  bf16   (layer picked by index_map, layer dim squeezed)
    # b_ref:   (1, O_pad)      f32
    # o_ref:   (TILE_M, O_pad) bf16
    del gid_ref
    acc = jnp.dot(x_ref[...], w_ref[...], preferred_element_type=jnp.float32)
    o_ref[...] = (acc + b_ref[...]).astype(o_ref.dtype)


def grouped_multibox_matmul(group_ids, x_concat, w_stack, b_stack, *, tile_m):
    """Grouped matmul over layer-tiles.

    group_ids: (num_tiles,) int32  -- layer id of each M-tile (contiguous groups)
    x_concat:  (num_tiles*tile_m, K_pad) bf16
    w_stack:   (L, K_pad, O_pad) bf16   -- fused [loc|conf] weights per layer
    b_stack:   (L, 1, O_pad)     f32
    returns:   (num_tiles*tile_m, O_pad) bf16
    """
    num_tiles = group_ids.shape[0]
    total_m, k_pad = x_concat.shape
    L, _, o_pad = w_stack.shape
    assert total_m == num_tiles * tile_m

    flops = 2 * total_m * k_pad * o_pad
    bytes_accessed = (
        x_concat.size * 2 + w_stack.size * 2 + b_stack.size * 4
        + total_m * o_pad * 2
    )

    # Double-buffered working set (x, w, b, out blocks) + headroom; capped so
    # it is valid on v7x (64 MiB physical VMEM per TensorCore).
    block_bytes = 2 * (tile_m * k_pad * 2 + k_pad * o_pad * 2
                       + o_pad * 4 + tile_m * o_pad * 2)
    vmem_limit = int(min(48 * 1024 * 1024, max(8 * 1024 * 1024, 2 * block_bytes)))

    # TODO(synk): if a profile still shows exposed DMA on the x stream, add
    # pipeline_mode=pl.Buffered(3) on the x BlockSpec and sweep 2-3.
    return pl.pallas_call(
        _fused_heads_kernel,
        out_shape=jax.ShapeDtypeStruct((total_m, o_pad), jnp.bfloat16),
        grid_spec=pltpu.PrefetchScalarGridSpec(
            num_scalar_prefetch=1,
            grid=(num_tiles,),
            in_specs=[
                pl.BlockSpec((tile_m, k_pad), lambda t, gid: (t, 0)),
                # Weight/bias block index comes from the group table; groups
                # are contiguous, so the block is re-fetched only when the
                # layer changes (L times total -> resident in VMEM otherwise).
                pl.BlockSpec((None, k_pad, o_pad), lambda t, gid: (gid[t], 0, 0)),
                pl.BlockSpec((None, 1, o_pad), lambda t, gid: (gid[t], 0, 0)),
            ],
            out_specs=pl.BlockSpec((tile_m, o_pad), lambda t, gid: (t, 0)),
        ),
        compiler_params=pltpu.CompilerParams(
            dimension_semantics=("parallel",),  # tile-granular megacore split
            vmem_limit_bytes=vmem_limit,
        ),
        cost_estimate=pl.CostEstimate(
            flops=flops, transcendentals=0, bytes_accessed=bytes_accessed
        ),
    )(group_ids, x_concat, w_stack, b_stack)


class MultiBoxPallas:
    """JAX/Pallas port of the PyTorch MultiBox module (1x1 conv heads)."""

    NUM_DEFAULTS = [16, 16, 20, 21]
    IN_CHANNELS = [832, 1024, 1024, 1024]
    K_PAD = 1024   # common (padded) contraction size across all layers
    TILE_M = 512   # production M-tile; multiple of 256 (v6e MXU), VMEM-safe on v7x

    def __init__(self, num_classes, key):
        self.num_classes = num_classes
        L = len(self.IN_CHANNELS)
        # Fused per-layer output width: [loc (nd*4) | conf (nd*num_classes)]
        self.head_widths = [nd * (4 + num_classes) for nd in self.NUM_DEFAULTS]
        self.O_pad = _round_up(max(self.head_widths), 128)  # lane-dense output

        w_fused, b_fused = [], []
        keys = jax.random.split(key, 4 * L)
        for i, (cin, nd) in enumerate(zip(self.IN_CHANNELS, self.NUM_DEFAULTS)):
            bound = 1.0 / float(cin) ** 0.5  # PyTorch-style fan_in uniform
            k0, k1, k2, k3 = keys[4 * i: 4 * i + 4]
            loc_out = nd * 4
            conf_out = nd * num_classes
            loc_w = jax.random.uniform(k0, (cin, loc_out), jnp.float32, -bound, bound)
            loc_b = jax.random.uniform(k1, (loc_out,), jnp.float32, -bound, bound)
            conf_w = jax.random.uniform(k2, (cin, conf_out), jnp.float32, -bound, bound)
            conf_b = jax.random.uniform(k3, (conf_out,), jnp.float32, -bound, bound)

            w = jnp.concatenate([loc_w, conf_w], axis=1)      # (cin, nd*(4+nc))
            b = jnp.concatenate([loc_b, conf_b], axis=0)      # (nd*(4+nc),)
            # Zero-pad K -> K_PAD and O -> O_pad (padding contributes nothing).
            w = jnp.pad(w, ((0, self.K_PAD - cin), (0, self.O_pad - w.shape[1])))
            b = jnp.pad(b, (0, self.O_pad - b.shape[0]))
            w_fused.append(w)
            b_fused.append(b)

        # Weights in bf16: halves HBM traffic, native bf16 MXU path.
        self.w_fused = jnp.stack(w_fused).astype(jnp.bfloat16)   # (L, K_PAD, O_pad)
        self.b_fused = jnp.stack(b_fused)[:, None, :]            # (L, 1, O_pad) f32

        # Jit the whole forward so cast/pad/concat/slice fuse with the kernel.
        self._jit_forward = jax.jit(self._forward)

    # ----- forward ---------------------------------------------------------
    def _forward(self, inputs, w_fused, b_fused):
        L = len(inputs)
        assert L == len(self.IN_CHANNELS)

        # Trace-time (static) shape math.
        ms = [x.shape[0] * x.shape[2] * x.shape[3] for x in inputs]
        # Shrink the production tile for tiny inputs so we don't DMA/compute
        # mostly padding at demo sizes (must stay a multiple of 8 sublanes).
        tile_m = min(self.TILE_M, _round_up(max(ms), 8))

        slabs, group_ids, offsets = [], [], []
        off = 0
        for i, x in enumerate(inputs):  # x: NCHW
            N, C, H, W = x.shape
            M = N * H * W
            m_pad = _round_up(M, tile_m)
            # NCHW -> NHWC -> (N*H*W, C): same element order as PyTorch's
            # permute(0,2,3,1).contiguous().
            # TODO(synk): accept NHWC activations upstream to drop this
            # transpose (a full extra HBM pass over the largest tensor).
            x2d = jnp.transpose(x, (0, 2, 3, 1)).reshape(M, C).astype(jnp.bfloat16)
            x2d = jnp.pad(x2d, ((0, m_pad - M), (0, self.K_PAD - C)))
            slabs.append(x2d)
            group_ids += [i] * (m_pad // tile_m)
            offsets.append(off)
            off += m_pad

        x_concat = jnp.concatenate(slabs, axis=0)             # (sum m_pad, K_PAD) bf16
        gid = jnp.asarray(group_ids, dtype=jnp.int32)          # (num_tiles,)

        out = grouped_multibox_matmul(
            gid, x_concat, w_fused, b_fused, tile_m=tile_m)    # (sum m_pad, O_pad) bf16

        loc_preds, conf_preds = [], []
        for i, x in enumerate(inputs):
            N, C, H, W = x.shape
            nd = self.NUM_DEFAULTS[i]
            M = N * H * W
            y = out[offsets[i]: offsets[i] + M, : nd * (4 + self.num_classes)]
            # Values carry bf16 rounding; cast back to f32 to match the
            # PyTorch module's output dtype.
            y = y.astype(jnp.float32)
            loc_preds.append(y[:, : nd * 4].reshape(N, H * W * nd, 4))
            conf_preds.append(y[:, nd * 4:].reshape(N, H * W * nd, self.num_classes))

        return (jnp.concatenate(loc_preds, axis=1),
                jnp.concatenate(conf_preds, axis=1))

    def __call__(self, inputs):
        return self._jit_forward(tuple(inputs), self.w_fused, self.b_fused)


if __name__ == "__main__":
    num_classes = 4
    N = 2
    spatial = [4, 2, 2, 1]  # small spatial sizes for the 4 feature maps

    root = jax.random.PRNGKey(0)
    pkey, xkey = jax.random.split(root)
    model = MultiBoxPallas(num_classes, pkey)

    xkeys = jax.random.split(xkey, len(spatial))
    inputs = [
        jax.random.normal(k, (N, c, s, s), jnp.float32)
        for k, c, s in zip(xkeys, MultiBoxPallas.IN_CHANNELS, spatial)
    ]

    loc_preds, conf_preds = model(inputs)
    loc_preds = jax.block_until_ready(loc_preds)
    conf_preds = jax.block_until_ready(conf_preds)

    # Pure-JAX reference (bf16-rounded operands, f32 math, no Pallas).
    ref_loc, ref_conf = [], []
    for i, x in enumerate(inputs):
        Nb, C, H, W = x.shape
        nd = MultiBoxPallas.NUM_DEFAULTS[i]
        M = Nb * H * W
        O_full = nd * (4 + num_classes)
        x2d = jnp.transpose(x, (0, 2, 3, 1)).reshape(M, C)
        x2d = x2d.astype(jnp.bfloat16).astype(jnp.float32)
        w = model.w_fused[i, :C, :O_full].astype(jnp.float32)
        b = model.b_fused[i, 0, :O_full]
        y = jnp.dot(x2d, w, precision=jax.lax.Precision.HIGHEST) + b
        ref_loc.append(y[:, : nd * 4].reshape(Nb, H * W * nd, 4))
        ref_conf.append(y[:, nd * 4:].reshape(Nb, H * W * nd, num_classes))
    ref_loc = jnp.concatenate(ref_loc, axis=1)
    ref_conf = jnp.concatenate(ref_conf, axis=1)

    assert loc_preds.shape == ref_loc.shape and conf_preds.shape == ref_conf.shape
    # Kernel output is stored in bf16 (accumulation in f32), so allow bf16-level noise.
    assert jnp.allclose(loc_preds, ref_loc, atol=2e-2, rtol=2e-2)
    assert jnp.allclose(conf_preds, ref_conf, atol=2e-2, rtol=2e-2)

    print("KERNEL_OK")
</pallas_src>

<mosaic_0001>
module attributes {stable_mosaic.version = 11 : i64} {
  func.func @_fused_heads_kernel(%arg0: i32, %arg1: memref<4xi32, #tpu.memory_space<smem>>, %arg2: memref<32x1024xbf16, #tpu.memory_space<vmem>>, %arg3: memref<1x1024x256xbf16, #tpu.memory_space<vmem>>, %arg4: memref<1x1x256xf32, #tpu.memory_space<vmem>>, %arg5: memref<32x256xbf16, #tpu.memory_space<vmem>>) attributes {dimension_semantics = [#tpu.dimension_semantics<parallel>], iteration_bounds = array<i64: 4>, scalar_prefetch = 1 : i64, scratch_operands = 0 : i64, tpu.core_type = #tpu.core_type<tc>, window_params = [{transform_indices = @transform_0, window_bounds = array<i64: 32, 1024>}, {transform_indices = @transform_1, window_bounds = array<i64: 1, 1024, 256>}, {transform_indices = @transform_2, window_bounds = array<i64: 1, 1, 256>}, {transform_indices = @transform_3, window_bounds = array<i64: 32, 256>}]} {
    %c0 = arith.constant 0 : index
    %c0_0 = arith.constant 0 : index
    %0 = vector.load %arg2[%c0, %c0_0] : memref<32x1024xbf16, #tpu.memory_space<vmem>>, vector<32x1024xbf16>
    %c0_1 = arith.constant 0 : index
    %c0_2 = arith.constant 0 : index
    %c0_3 = arith.constant 0 : index
    %1 = vector.load %arg3[%c0_1, %c0_2, %c0_3] : memref<1x1024x256xbf16, #tpu.memory_space<vmem>>, vector<1x1024x256xbf16>
    %2 = vector.shape_cast %1 : vector<1x1024x256xbf16> to vector<1024x256xbf16>
    %cst = arith.constant dense<0.000000e+00> : vector<32x256xf32>
    %3 = tpu.matmul %0, %2, %cst {dimension_numbers = #tpu.dot_dimension_numbers<[1], [0], [0], [1], [0, 0, 1, 1], [], []>} : vector<32x1024xbf16>, vector<1024x256xbf16>, vector<32x256xf32> -> vector<32x256xf32>
    %c0_4 = arith.constant 0 : index
    %c0_5 = arith.constant 0 : index
    %c0_6 = arith.constant 0 : index
    %4 = vector.load %arg4[%c0_4, %c0_5, %c0_6] : memref<1x1x256xf32, #tpu.memory_space<vmem>>, vector<1x1x256xf32>
    %5 = vector.shape_cast %4 : vector<1x1x256xf32> to vector<1x256xf32>
    %6 = vector.broadcast %5 : vector<1x256xf32> to vector<32x256xf32>
    %7 = arith.addf %3, %6 : vector<32x256xf32>
    %8 = arith.truncf %7 : vector<32x256xf32> to vector<32x256xbf16>
    %c0_7 = arith.constant 0 : index
    %c0_8 = arith.constant 0 : index
    %9 = vector.load %arg5[%c0_7, %c0_8] : memref<32x256xbf16, #tpu.memory_space<vmem>>, vector<32x256xbf16>
    tpu.vector_store %arg5[%c0_7, %c0_8], %8 {strides = array<i32>} : memref<32x256xbf16, #tpu.memory_space<vmem>>, vector<32x256xbf16>,
    return
  }
  func.func @transform_0(%arg0: i32, %arg1: memref<4xi32, #tpu.memory_space<smem>>) -> (i32, i32) {
    %c0_i32 = arith.constant 0 : i32
    %c0_i32_0 = arith.constant 0 : i32
    return %arg0, %c0_i32 : i32, i32
  }
  func.func @transform_1(%arg0: i32, %arg1: memref<4xi32, #tpu.memory_space<smem>>) -> (i32, i32, i32) {
    %0 = arith.index_cast %arg0 : i32 to index
    %1 = memref.load %arg1[%0] : memref<4xi32, #tpu.memory_space<smem>>
    %c0_i32 = arith.constant 0 : i32
    %c0_i32_0 = arith.constant 0 : i32
    %c0_i32_1 = arith.constant 0 : i32
    return %1, %c0_i32, %c0_i32_0 : i32, i32, i32
  }
  func.func @transform_2(%arg0: i32, %arg1: memref<4xi32, #tpu.memory_space<smem>>) -> (i32, i32, i32) {
    %0 = arith.index_cast %arg0 : i32 to index
    %1 = memref.load %arg1[%0] : memref<4xi32, #tpu.memory_space<smem>>
    %c0_i32 = arith.constant 0 : i32
    %c0_i32_0 = arith.constant 0 : i32
    %c0_i32_1 = arith.constant 0 : i32
    return %1, %c0_i32, %c0_i32_0 : i32, i32, i32
  }
  func.func @transform_3(%arg0: i32, %arg1: memref<4xi32, #tpu.memory_space<smem>>) -> (i32, i32) {
    %c0_i32 = arith.constant 0 : i32
    %c0_i32_0 = arith.constant 0 : i32
    return %arg0, %c0_i32 : i32, i32
  }
}

</mosaic_0001>

<llo_original>
// kernel: _forward.1
$region0: #{_forward.1}
  #allocation0 [shape = 'u32[]', space=smem, size = 0x4, offset = 0x4, fixed_abs, tag = 'smem constant byte address 0x4 - core index']
  #allocation1 [shape = 'u32[144,128]{1,0:T(1,128)}', space=vmem, size = 0x12000, scoped, tag = 'internal scratch']
  #allocation2 [shape = 's32[1]{0}', space=sflag, size = 0x4, scoped, tag = 'scoped memory for _forward.1']
  #allocation3 [shape = 'u8[512]{0}', space=smem, size = 0x200, scoped, tag = 'prefetched SMEM operand 0']
  %s0 = inlined_call_operand.vmem [shape: s32[4], index: 0, kind: input, shape index: {}]
  %s1 = inlined_call_operand.vmem [shape: bf16[128,1024], index: 1, kind: input, shape index: {}]
  %s2 = inlined_call_operand.hbm [shape: bf16[4,1024,256], index: 2, kind: input, shape index: {}]
  %s3 = inlined_call_operand.hbm [shape: f32[4,1,256], index: 3, kind: input, shape index: {}]
  %s4 = inlined_call_operand.vmem [shape: bf16[128,256], index: 4, kind: output, shape index: {}]
  %s5 = sld [smem:[#allocation0]]
  $region53: #{_forward.1} parent=0
    _
  %s7 = ssub.s32 1, %s5
  %s8 = scalar_select 0, %s7, %s5
  %s9 = sshll.u32 %s0, 4
  %s10 = int_to_ptr.vmem [resolvable:$true] %s9
  %12 = dma.vmem_to_smem %s10, 16, [#allocation3], [#allocation2]
  %13 = dma.done [#allocation2], 16
  %14 = sfence
  $region1: #{_forward.1} parent=0
    #allocation4 [shape = 'u8[1048576]{0}', space=vmem, size = 0x100000, scoped, tag = 'input window, operand 2']
    #allocation5 [shape = 's32[2]{0}', space=sflag, size = 0x8, scoped, tag = 'scoped memory for _forward.1']
    #allocation6 [shape = 'u8[2048]{0}', space=vmem, size = 0x800, scoped, tag = 'input window, operand 3']
    #allocation7 [shape = 's32[2]{0}', space=sflag, size = 0x8, scoped, tag = 'scoped memory for _forward.1']
    %15 = vsyncpa [#allocation5], 0
    %s16 = scalar_lea.sflag [#allocation5], 1
    %17 = vsyncpa %s16, 0
    %18 = vsyncpa [#allocation7], 0
    %s19 = scalar_lea.sflag [#allocation7], 1
    %20 = vsyncpa %s19, 0
    loop: start=0, step=1, limit=6
    $region2: #{_forward.1} parent=1 // loop_pre_header
      _
    $region3: #{_forward.1} parent=1 // loop_header
      %s22 = sphi 0, %s26
      %p23 = scmp.ge.s32.totalorder %s22, 6
      %s32 = sphi 0, %s34
      %s35 = sphi 0, %s32
      %s36 = sphi 0, %s35
      %s52 = sphi 0, %s36
      %s60 = sphi 0, %s62
      %s63 = sphi 0, %s60
      %s64 = sphi 0, %s63
      %s80 = sphi 0, %s64
      %s88 = sphi 0, %s90
      %s91 = sphi 0, %s88
      %s92 = sphi 0, %s91
      %s108 = sphi 0, %s92
      %s114 = sphi 0, %s116
      %s117 = sphi 0, %s114
      %s118 = sphi 0, %s117
      %s134 = sphi 0, %s118
    $region4: #{_forward.1} parent=1 // loop_header_branch
      %25 = sbr.rel (%p23) target = $region8
    $region5: #{_forward.1} parent=1 // loop_body
      %s27 = ssub.s32 %s22, 1
      %s28 = ssub.s32 %s22, 2
      %s29 = sadd.s32 %s22, 1
      %s30 = ssub.s32 %s22, %s29
      %p31 = scmp.eq.s32.totalorder %s30, 0
      %s33 = sadd.s32 %s32, 1
      %s34 = scalar_select %p31, %s32, %s33
      %p37 = pneg %p31
      %p38 = scmp.eq.s32.totalorder %s22, 3
      %p39 = por %p37, %p38
      %p40 = scmp.ne.s32.totalorder %s32, %s35
      %p41 = scmp.eq.s32.totalorder %s22, 0
      %p42 = por %p40, %p41
      %p43 = scmp.ne.s32.totalorder %s32, %s35
      %p44 = scmp.eq.s32.totalorder %s27, 3
      %p45 = por %p43, %p44
      %p46 = scmp.ne.s32.totalorder %s35, %s36
      %p47 = scmp.eq.s32.totalorder %s27, 0
      %p48 = por %p46, %p47
      %p49 = scmp.ne.s32.totalorder %s35, %s36
      %p50 = scmp.eq.s32.totalorder %s28, 3
      %p51 = por %p49, %p50
      %p53 = scmp.ne.s32.totalorder %s36, %s52
      %p54 = scmp.eq.s32.totalorder %s28, 0
      %p55 = por %p53, %p54
      %s56 = sld [smem:[#allocation3 + %s22]]
      %s57 = sld [smem:[#allocation3 + %s29]]
      %s58 = ssub.s32 %s56, %s57
      %p59 = scmp.eq.s32.totalorder %s58, 0
      %s61 = sadd.s32 %s60, 1
      %s62 = scalar_select %p59, %s60, %s61
      %p65 = pneg %p59
      %p66 = scmp.eq.s32.totalorder %s22, 3
      %p67 = por %p65, %p66
      %p68 = scmp.ne.s32.totalorder %s60, %s63
      %p69 = scmp.eq.s32.totalorder %s22, 0
      %p70 = por %p68, %p69
      %p71 = scmp.ne.s32.totalorder %s60, %s63
      %p72 = scmp.eq.s32.totalorder %s27, 3
      %p73 = por %p71, %p72
      %p74 = scmp.ne.s32.totalorder %s63, %s64
      %p75 = scmp.eq.s32.totalorder %s27, 0
      %p76 = por %p74, %p75
      %p77 = scmp.ne.s32.totalorder %s63, %s64
      %p78 = scmp.eq.s32.totalorder %s28, 3
      %p79 = por %p77, %p78
      %p81 = scmp.ne.s32.totalorder %s64, %s80
      %p82 = scmp.eq.s32.totalorder %s28, 0
      %p83 = por %p81, %p82
      %s84 = sld [smem:[#allocation3 + %s22]]
      %s85 = sld [smem:[#allocation3 + %s29]]
      %s86 = ssub.s32 %s84, %s85
      %p87 = scmp.eq.s32.totalorder %s86, 0
      %s89 = sadd.s32 %s88, 1
      %s90 = scalar_select %p87, %s88, %s89
      %p93 = pneg %p87
      %p94 = scmp.eq.s32.totalorder %s22, 3
      %p95 = por %p93, %p94
      %p96 = scmp.ne.s32.totalorder %s88, %s91
      %p97 = scmp.eq.s32.totalorder %s22, 0
      %p98 = por %p96, %p97
      %p99 = scmp.ne.s32.totalorder %s88, %s91
      %p100 = scmp.eq.s32.totalorder %s27, 3
      %p101 = por %p99, %p100
      %p102 = scmp.ne.s32.totalorder %s91, %s92
      %p103 = scmp.eq.s32.totalorder %s27, 0
      %p104 = por %p102, %p103
      %p105 = scmp.ne.s32.totalorder %s91, %s92
      %p106 = scmp.eq.s32.totalorder %s28, 3
      %p107 = por %p105, %p106
      %p109 = scmp.ne.s32.totalorder %s92, %s108
      %p110 = scmp.eq.s32.totalorder %s28, 0
      %p111 = por %p109, %p110
      %s112 = ssub.s32 %s22, %s29
      %p113 = scmp.eq.s32.totalorder %s112, 0
      %s115 = sadd.s32 %s114, 1
      %s116 = scalar_select %p113, %s114, %s115
      %p119 = pneg %p113
      %p120 = scmp.eq.s32.totalorder %s22, 3
      %p121 = por %p119, %p120
      %p122 = scmp.ne.s32.totalorder %s114, %s117
      %p123 = scmp.eq.s32.totalorder %s22, 0
      %p124 = por %p122, %p123
      %p125 = scmp.ne.s32.totalorder %s114, %s117
      %p126 = scmp.eq.s32.totalorder %s27, 3
      %p127 = por %p125, %p126
      %p128 = scmp.ne.s32.totalorder %s117, %s118
      %p129 = scmp.eq.s32.totalorder %s27, 0
      %p130 = por %p128, %p129
      %p131 = scmp.ne.s32.totalorder %s117, %s118
      %p132 = scmp.eq.s32.totalorder %s28, 3
      %p133 = por %p131, %p132
      %p135 = scmp.ne.s32.totalorder %s118, %s134
      %p136 = scmp.eq.s32.totalorder %s28, 0
      %p137 = por %p135, %p136
      %p138 = scmp.le.s32.totalorder 1, %s22
      %p139 = scmp.lt.s32.totalorder %s22, 5
      %p140 = pnand %p138, %p139
      %p141 = pneg %p140
      // Predicated region
      $region9: #{_forward.1} parent=5 // pred_check
        _
      $region10: #{_forward.1} parent=5 // pred_check_branch
        %143 = sbr.rel (%p140) target = $region12
      $region11: #{_forward.1} parent=5 // pred_region
        %s144 = ssub.s32 %s22, 1
      $region12: #{_forward.1} parent=5 // pred_fallthru
        _
      %p145 = scmp.lt.s32.totalorder %s22, 4
      // Predicated region
      $region13: #{_forward.1} parent=5 // pred_check
        %p146 = pneg %p145
      $region14: #{_forward.1} parent=5 // pred_check_branch
        %148 = sbr.rel (%p146) target = $region16
      $region15: #{_forward.1} parent=5 // pred_region
        // Predicated region
        $region17: #{_forward.1} parent=15 // pred_check
          %p149 = pneg %p42
        $region18: #{_forward.1} parent=15 // pred_check_branch
          %151 = sbr.rel (%p149) target = $region20
        $region19: #{_forward.1} parent=15 // pred_region
          %s152 = smul.u32 4, %s22
          %p153 = scmp.lt.s32.totalorder %s152, 15
          %s154 = scalar_select %p153, %s152, 15
          %s155 = smul.addr %s154, 8
          %s156 = smul.addr %s155, 4
          %s157 = scalar_lea.vmem %s1, %s156
          %s158 = smul.u32 4, %s22
        $region20: #{_forward.1} parent=15 // pred_fallthru
          _
        // Predicated region
        $region21: #{_forward.1} parent=15 // pred_check
          %p159 = pneg %p70
        $region22: #{_forward.1} parent=15 // pred_check_branch
          %161 = sbr.rel (%p159) target = $region24
        $region23: #{_forward.1} parent=15 // pred_region
          %s162 = sand.u32 %s60, 1
          %s163 = scalar_lea.sflag [#allocation5], %s162
          %s164 = sand.u32 %s60, 1
          %s165 = smul.addr %s164, 1024
          %s166 = scalar_lea.vmem [#allocation4], %s165
          %s167 = sld [smem:[#allocation3 + %s22]]
          %s169 = ssub.s32 16384, 16384
          %170 = vsyncadd %s163, %s169
          %s171 = smul.addr %s167, 256
          %s172 = smul.addr %s171, 64
          %s173 = scalar_lea.hbm %s2, %s172
          %s174 = sshll.u32 %s166, 4
          %s175 = int_to_ptr.vmem [resolvable:$true] %s174
          %180 = dma.hbm_to_vmem [thread:$0]  %s173, 16384, %s175, %s163, 128, 128, 8
        $region24: #{_forward.1} parent=15 // pred_fallthru
          _
        // Predicated region
        $region25: #{_forward.1} parent=15 // pred_check
          %p181 = pneg %p98
        $region26: #{_forward.1} parent=15 // pred_check_branch
          %183 = sbr.rel (%p181) target = $region28
        $region27: #{_forward.1} parent=15 // pred_region
          %s184 = sand.u32 %s88, 1
          %s185 = scalar_lea.sflag [#allocation7], %s184
          %s186 = sand.u32 %s88, 1
          %s187 = smul.addr %s186, 2
          %s188 = scalar_lea.vmem [#allocation6], %s187
          %s189 = sld [smem:[#allocation3 + %s22]]
          %s191 = ssub.s32 32, 32
          %192 = vsyncadd %s185, %s191
          %s193 = smul.addr %s189, 2
          %s194 = smul.addr %s193, 16
          %s195 = scalar_lea.hbm %s3, %s194
          %s197 = sshll.u32 %s188, 4
          %s198 = int_to_ptr.vmem [resolvable:$true] %s197
          %200 = dma.hbm_to_vmem [thread:$0]  %s195, 32, %s198, %s185
        $region28: #{_forward.1} parent=15 // pred_fallthru
          _
      $region16: #{_forward.1} parent=5 // pred_fallthru
        _
      %p201 = scmp.le.s32.totalorder 1, %s22
      %p202 = scmp.lt.s32.totalorder %s22, 5
      %p203 = pnand %p201, %p202
      %p204 = pneg %p203
      // Predicated region
      $region29: #{_forward.1} parent=5 // pred_check
        _
      $region30: #{_forward.1} parent=5 // pred_check_branch
        %206 = sbr.rel (%p203) target = $region32
      $region31: #{_forward.1} parent=5 // pred_region
        %s207 = ssub.s32 %s22, 1
        %s208 = sand.u32 %s63, 1
        %s209 = scalar_lea.sflag [#allocation5], %s208
        %s210 = sand.u32 %s63, 1
        %s211 = smul.addr %s210, 1024
        %s212 = scalar_lea.vmem [#allocation4], %s211
        // Predicated region
        $region33: #{_forward.1} parent=31 // pred_check
          %p213 = pneg %p76
        $region34: #{_forward.1} parent=31 // pred_check_branch
          %215 = sbr.rel (%p213) target = $region36
        $region35: #{_forward.1} parent=31 // pred_region
          %216 = dma.done %s209, 16384
        $region36: #{_forward.1} parent=31 // pred_fallthru
          _
        %s217 = sand.u32 %s91, 1
        %s218 = scalar_lea.sflag [#allocation7], %s217
        %s219 = sand.u32 %s91, 1
        %s220 = smul.addr %s219, 2
        %s221 = scalar_lea.vmem [#allocation6], %s220
        // Predicated region
        $region37: #{_forward.1} parent=31 // pred_check
          %p222 = pneg %p104
        $region38: #{_forward.1} parent=31 // pred_check_branch
          %224 = sbr.rel (%p222) target = $region40
        $region39: #{_forward.1} parent=31 // pred_region
          %225 = dma.done %s218, 32
        $region40: #{_forward.1} parent=31 // pred_fallthru
          _
        %s226 = smul.u32 4, %s27
        %p227 = scmp.lt.s32.totalorder %s226, 15
        %s228 = scalar_select %p227, %s226, 15
        %s229 = smul.addr %s228, 8
        %s230 = smul.addr %s229, 4
        %s231 = scalar_lea.vmem %s1, %s230
        %p232 = pneg %p48
        %p233 = pneg %p45
        %s234 = sand.u32 %s63, 1
        %s235 = scalar_lea.sflag [#allocation5], %s234
        %s236 = sand.u32 %s63, 1
        %s237 = smul.addr %s236, 1024
        %s238 = scalar_lea.vmem [#allocation4], %s237
        %p239 = pneg %p76
        %p240 = pneg %p73
        %s241 = sand.u32 %s91, 1
        %s242 = scalar_lea.sflag [#allocation7], %s241
        %s243 = sand.u32 %s91, 1
        %s244 = smul.addr %s243, 2
        %s245 = scalar_lea.vmem [#allocation6], %s244
        %p246 = pneg %p104
        %p247 = pneg %p101
        %p248 = pneg %p130
        %p249 = pneg %p127
        %s250 = smul.u32 4, %s27
        %p251 = scmp.lt.s32.totalorder %s250, 15
        %s252 = scalar_select %p251, %s250, 15
        %s253 = smul.addr %s252, 2
        %s254 = smul.addr %s253, 4
        %s255 = scalar_lea.vmem %s4, %s254
        %s256 = smul.u32 4, %s27
        %p257 = scmp.lt.s32.totalorder %s256, 15
        %s258 = scalar_select %p257, %s256, 15
        %s259 = smul.addr %s258, 8
        %s260 = smul.addr %s259, 4
        %s261 = scalar_lea.vmem %s1, %s260
        %s262 = smul.u32 4, %s27
        %s263 = sld [smem:[#allocation3 + %s27]]
        %s264 = sld [smem:[#allocation3 + %s27]]
        %s265 = smul.u32 4, %s27
        %p266 = scmp.lt.s32.totalorder %s265, 15
        %s267 = scalar_select %p266, %s265, 15
        %s268 = smul.addr %s267, 2
        %s269 = smul.addr %s268, 4
        %s270 = scalar_lea.vmem %s4, %s269
        %s271 = smul.u32 4, %s27
        %v272 = vld [vmem:[%s261] sm:$0xff]
        %v273 = vld [vmem:[%s261 + $0x8] sm:$0xff]
        %v274 = vld [vmem:[%s261 + $0x10] sm:$0xff]
        %v275 = vld [vmem:[%s261 + $0x18] sm:$0xff]
        %v276 = vld [vmem:[%s261 + $0x20] sm:$0xff]
        %v277 = vld [vmem:[%s261 + $0x28] sm:$0xff]
        %v278 = vld [vmem:[%s261 + $0x30] sm:$0xff]
        %v279 = vld [vmem:[%s261 + $0x38] sm:$0xff]
        %v280 = vld [vmem:[%s261 + $0x40] sm:$0xff]
        %v281 = vld [vmem:[%s261 + $0x48] sm:$0xff]
        %v282 = vld [vmem:[%s261 + $0x50] sm:$0xff]
        %v283 = vld [vmem:[%s261 + $0x58] sm:$0xff]
        %v284 = vld [vmem:[%s261 + $0x60] sm:$0xff]
        %v285 = vld [vmem:[%s261 + $0x68] sm:$0xff]
        %v286 = vld [vmem:[%s261 + $0x70] sm:$0xff]
        %v287 = vld [vmem:[%s261 + $0x78] sm:$0xff]
        %v288 = vld [vmem:[%s212] sm:$0xff]
        %v289 = vld [vmem:[%s212 + $0x8] sm:$0xff]
        %v290 = vld [vmem:[%s212 + $0x10] sm:$0xff]
        %v291 = vld [vmem:[%s212 + $0x18] sm:$0xff]
        %v292 = vld [vmem:[%s212 + $0x20] sm:$0xff]
        %v293 = vld [vmem:[%s212 + $0x28] sm:$0xff]
        %v294 = vld [vmem:[%s212 + $0x30] sm:$0xff]
        %v295 = vld [vmem:[%s212 + $0x38] sm:$0xff]
        %v296 = vld [vmem:[%s212 + $0x40] sm:$0xff]
        %v297 = vld [vmem:[%s212 + $0x48] sm:$0xff]
        %v298 = vld [vmem:[%s212 + $0x50] sm:$0xff]
        %v299 = vld [vmem:[%s212 + $0x58] sm:$0xff]
        %v300 = vld [vmem:[%s212 + $0x60] sm:$0xff]
        %v301 = vld [vmem:[%s212 + $0x68] sm:$0xff]
        %v302 = vld [vmem:[%s212 + $0x70] sm:$0xff]
        %v303 = vld [vmem:[%s212 + $0x78] sm:$0xff]
        %v304 = vld [vmem:[%s212 + $0x80] sm:$0xff]
        %v305 = vld [vmem:[%s212 + $0x88] sm:$0xff]
        %v306 = vld [vmem:[%s212 + $0x90] sm:$0xff]
        %v307 = vld [vmem:[%s212 + $0x98] sm:$0xff]
        %v308 = vld [vmem:[%s212 + $0xa0] sm:$0xff]
        %v309 = vld [vmem:[%s212 + $0xa8] sm:$0xff]
        %v310 = vld [vmem:[%s212 + $0xb0] sm:$0xff]
        %v311 = vld [vmem:[%s212 + $0xb8] sm:$0xff]
        %v312 = vld [vmem:[%s212 + $0xc0] sm:$0xff]
        %v313 = vld [vmem:[%s212 + $0xc8] sm:$0xff]
        %v314 = vld [vmem:[%s212 + $0xd0] sm:$0xff]
        %v315 = vld [vmem:[%s212 + $0xd8] sm:$0xff]
        %v316 = vld [vmem:[%s212 + $0xe0] sm:$0xff]
        %v317 = vld [vmem:[%s212 + $0xe8] sm:$0xff]
        %v318 = vld [vmem:[%s212 + $0xf0] sm:$0xff]
        %v319 = vld [vmem:[%s212 + $0xf8] sm:$0xff]
        %v320 = vld [vmem:[%s212 + $0x100] sm:$0xff]
        %v321 = vld [vmem:[%s212 + $0x108] sm:$0xff]
        %v322 = vld [vmem:[%s212 + $0x110] sm:$0xff]
        %v323 = vld [vmem:[%s212 + $0x118] sm:$0xff]
        %v324 = vld [vmem:[%s212 + $0x120] sm:$0xff]
        %v325 = vld [vmem:[%s212 + $0x128] sm:$0xff]
        %v326 = vld [vmem:[%s212 + $0x130] sm:$0xff]
        %v327 = vld [vmem:[%s212 + $0x138] sm:$0xff]
        %v328 = vld [vmem:[%s212 + $0x140] sm:$0xff]
        %v329 = vld [vmem:[%s212 + $0x148] sm:$0xff]
        %v330 = vld [vmem:[%s212 + $0x150] sm:$0xff]
        %v331 = vld [vmem:[%s212 + $0x158] sm:$0xff]
        %v332 = vld [vmem:[%s212 + $0x160] sm:$0xff]
        %v333 = vld [vmem:[%s212 + $0x168] sm:$0xff]
        %v334 = vld [vmem:[%s212 + $0x170] sm:$0xff]
        %v335 = vld [vmem:[%s212 + $0x178] sm:$0xff]
        %v336 = vld [vmem:[%s212 + $0x180] sm:$0xff]
        %v337 = vld [vmem:[%s212 + $0x188] sm:$0xff]
        %v338 = vld [vmem:[%s212 + $0x190] sm:$0xff]
        %v339 = vld [vmem:[%s212 + $0x198] sm:$0xff]
        %v340 = vld [vmem:[%s212 + $0x1a0] sm:$0xff]
        %v341 = vld [vmem:[%s212 + $0x1a8] sm:$0xff]
        %v342 = vld [vmem:[%s212 + $0x1b0] sm:$0xff]
        %v343 = vld [vmem:[%s212 + $0x1b8] sm:$0xff]
        %v344 = vld [vmem:[%s212 + $0x1c0] sm:$0xff]
        %v345 = vld [vmem:[%s212 + $0x1c8] sm:$0xff]
        %v346 = vld [vmem:[%s212 + $0x1d0] sm:$0xff]
        %v347 = vld [vmem:[%s212 + $0x1d8] sm:$0xff]
        %v348 = vld [vmem:[%s212 + $0x1e0] sm:$0xff]
        %v349 = vld [vmem:[%s212 + $0x1e8] sm:$0xff]
        %v350 = vld [vmem:[%s212 + $0x1f0] sm:$0xff]
        %v351 = vld [vmem:[%s212 + $0x1f8] sm:$0xff]
        %v352 = vld [vmem:[%s212 + $0x200] sm:$0xff]
        %v353 = vld [vmem:[%s212 + $0x208] sm:$0xff]
        %v354 = vld [vmem:[%s212 + $0x210] sm:$0xff]
        %v355 = vld [vmem:[%s212 + $0x218] sm:$0xff]
        %v356 = vld [vmem:[%s212 + $0x220] sm:$0xff]
        %v357 = vld [vmem:[%s212 + $0x228] sm:$0xff]
        %v358 = vld [vmem:[%s212 + $0x230] sm:$0xff]
        %v359 = vld [vmem:[%s212 + $0x238] sm:$0xff]
        %v360 = vld [vmem:[%s212 + $0x240] sm:$0xff]
        %v361 = vld [vmem:[%s212 + $0x248] sm:$0xff]
        %v362 = vld [vmem:[%s212 + $0x250] sm:$0xff]
        %v363 = vld [vmem:[%s212 + $0x258] sm:$0xff]
        %v364 = vld [vmem:[%s212 + $0x260] sm:$0xff]
        %v365 = vld [vmem:[%s212 + $0x268] sm:$0xff]
        %v366 = vld [vmem:[%s212 + $0x270] sm:$0xff]
        %v367 = vld [vmem:[%s212 + $0x278] sm:$0xff]
        %v368 = vld [vmem:[%s212 + $0x280] sm:$0xff]
        %v369 = vld [vmem:[%s212 + $0x288] sm:$0xff]
        %v370 = vld [vmem:[%s212 + $0x290] sm:$0xff]
        %v371 = vld [vmem:[%s212 + $0x298] sm:$0xff]
        %v372 = vld [vmem:[%s212 + $0x2a0] sm:$0xff]
        %v373 = vld [vmem:[%s212 + $0x2a8] sm:$0xff]
        %v374 = vld [vmem:[%s212 + $0x2b0] sm:$0xff]
        %v375 = vld [vmem:[%s212 + $0x2b8] sm:$0xff]
        %v376 = vld [vmem:[%s212 + $0x2c0] sm:$0xff]
        %v377 = vld [vmem:[%s212 + $0x2c8] sm:$0xff]
        %v378 = vld [vmem:[%s212 + $0x2d0] sm:$0xff]
        %v379 = vld [vmem:[%s212 + $0x2d8] sm:$0xff]
        %v380 = vld [vmem:[%s212 + $0x2e0] sm:$0xff]
        %v381 = vld [vmem:[%s212 + $0x2e8] sm:$0xff]
        %v382 = vld [vmem:[%s212 + $0x2f0] sm:$0xff]
        %v383 = vld [vmem:[%s212 + $0x2f8] sm:$0xff]
        %v384 = vld [vmem:[%s212 + $0x300] sm:$0xff]
        %v385 = vld [vmem:[%s212 + $0x308] sm:$0xff]
        %v386 = vld [vmem:[%s212 + $0x310] sm:$0xff]
        %v387 = vld [vmem:[%s212 + $0x318] sm:$0xff]
        %v388 = vld [vmem:[%s212 + $0x320] sm:$0xff]
        %v389 = vld [vmem:[%s212 + $0x328] sm:$0xff]
        %v390 = vld [vmem:[%s212 + $0x330] sm:$0xff]
        %v391 = vld [vmem:[%s212 + $0x338] sm:$0xff]
        %v392 = vld [vmem:[%s212 + $0x340] sm:$0xff]
        %v393 = vld [vmem:[%s212 + $0x348] sm:$0xff]
        %v394 = vld [vmem:[%s212 + $0x350] sm:$0xff]
        %v395 = vld [vmem:[%s212 + $0x358] sm:$0xff]
        %v396 = vld [vmem:[%s212 + $0x360] sm:$0xff]
        %v397 = vld [vmem:[%s212 + $0x368] sm:$0xff]
        %v398 = vld [vmem:[%s212 + $0x370] sm:$0xff]
        %v399 = vld [vmem:[%s212 + $0x378] sm:$0xff]
        %v400 = vld [vmem:[%s212 + $0x380] sm:$0xff]
        %v401 = vld [vmem:[%s212 + $0x388] sm:$0xff]
        %v402 = vld [vmem:[%s212 + $0x390] sm:$0xff]
        %v403 = vld [vmem:[%s212 + $0x398] sm:$0xff]
        %v404 = vld [vmem:[%s212 + $0x3a0] sm:$0xff]
        %v405 = vld [vmem:[%s212 + $0x3a8] sm:$0xff]
        %v406 = vld [vmem:[%s212 + $0x3b0] sm:$0xff]
        %v407 = vld [vmem:[%s212 + $0x3b8] sm:$0xff]
        %v408 = vld [vmem:[%s212 + $0x3c0] sm:$0xff]
        %v409 = vld [vmem:[%s212 + $0x3c8] sm:$0xff]
        %v410 = vld [vmem:[%s212 + $0x3d0] sm:$0xff]
        %v411 = vld [vmem:[%s212 + $0x3d8] sm:$0xff]
        %v412 = vld [vmem:[%s212 + $0x3e0] sm:$0xff]
        %v413 = vld [vmem:[%s212 + $0x3e8] sm:$0xff]
        %v414 = vld [vmem:[%s212 + $0x3f0] sm:$0xff]
        %v415 = vld [vmem:[%s212 + $0x3f8] sm:$0xff]
        %v416 = vld [vmem:[%s221] sm:$0x3]
        %v418 = vlaneseq
        %v419 = vshrl.u32 %v418, 7
        %v420 = vsub.s32 0, %v419
        %v421 = vrot.slane %v416, %v420
        %v422 = vlaneseq
        %v423 = vshrl.u32 %v422, 7
        %v424 = vsub.s32 1, %v423
        %v425 = vrot.slane %v416, %v424
        %v444 = vunpack.c.l.b16 %v272
        %v445 = vunpack.c.h.b16 %v272
        %v446 = vunpack.c.l.b16 %v273
        %v447 = vunpack.c.h.b16 %v273
        %v448 = vunpack.c.l.b16 %v274
        %v449 = vunpack.c.h.b16 %v274
        %v450 = vunpack.c.l.b16 %v275
        %v451 = vunpack.c.h.b16 %v275
        %v452 = vunpack.c.l.b16 %v276
        %v453 = vunpack.c.h.b16 %v276
        %v454 = vunpack.c.l.b16 %v277
        %v455 = vunpack.c.h.b16 %v277
        %v456 = vunpack.c.l.b16 %v278
        %v457 = vunpack.c.h.b16 %v278
        %v458 = vunpack.c.l.b16 %v279
        %v459 = vunpack.c.h.b16 %v279
        %v460 = vunpack.c.l.b16 %v280
        %v461 = vunpack.c.h.b16 %v280
        %v462 = vunpack.c.l.b16 %v281
        %v463 = vunpack.c.h.b16 %v281
        %v464 = vunpack.c.l.b16 %v282
        %v465 = vunpack.c.h.b16 %v282
        %v466 = vunpack.c.l.b16 %v283
        %v467 = vunpack.c.h.b16 %v283
        %v468 = vunpack.c.l.b16 %v284
        %v469 = vunpack.c.h.b16 %v284
        %v470 = vunpack.c.l.b16 %v285
        %v471 = vunpack.c.h.b16 %v285
        %v472 = vunpack.c.l.b16 %v286
        %v473 = vunpack.c.h.b16 %v286
        %v474 = vunpack.c.l.b16 %v287
        %v475 = vunpack.c.h.b16 %v287
        %v476 = vpack.c.b16 %v452, %v444
        %v477 = vpack.c.b16 %v453, %v445
        %v478 = vpack.c.b16 %v454, %v446
        %v479 = vpack.c.b16 %v455, %v447
        %v480 = vpack.c.b16 %v456, %v448
        %v481 = vpack.c.b16 %v457, %v449
        %v482 = vpack.c.b16 %v458, %v450
        %v483 = vpack.c.b16 %v459, %v451
        %v484 = vpack.c.b16 %v468, %v460
        %v485 = vpack.c.b16 %v469, %v461
        %v486 = vpack.c.b16 %v470, %v462
        %v487 = vpack.c.b16 %v471, %v463
        %v488 = vpack.c.b16 %v472, %v464
        %v489 = vpack.c.b16 %v473, %v465
        %v490 = vpack.c.b16 %v474, %v466
        %v491 = vpack.c.b16 %v475, %v467
        %v636 = vunpack.c.l.b16 %v288
        %v637 = vunpack.c.h.b16 %v288
        %v638 = vunpack.c.l.b16 %v289
        %v639 = vunpack.c.h.b16 %v289
        %v640 = vunpack.c.l.b16 %v290
        %v641 = vunpack.c.h.b16 %v290
        %v642 = vunpack.c.l.b16 %v291
        %v643 = vunpack.c.h.b16 %v291
        %v644 = vunpack.c.l.b16 %v292
        %v645 = vunpack.c.h.b16 %v292
        %v646 = vunpack.c.l.b16 %v293
        %v647 = vunpack.c.h.b16 %v293
        %v648 = vunpack.c.l.b16 %v294
        %v649 = vunpack.c.h.b16 %v294
        %v650 = vunpack.c.l.b16 %v295
        %v651 = vunpack.c.h.b16 %v295
        %v652 = vunpack.c.l.b16 %v296
        %v653 = vunpack.c.h.b16 %v296
        %v654 = vunpack.c.l.b16 %v297
        %v655 = vunpack.c.h.b16 %v297
        %v656 = vunpack.c.l.b16 %v298
        %v657 = vunpack.c.h.b16 %v298
        %v658 = vunpack.c.l.b16 %v299
        %v659 = vunpack.c.h.b16 %v299
        %v660 = vunpack.c.l.b16 %v300
        %v661 = vunpack.c.h.b16 %v300
        %v662 = vunpack.c.l.b16 %v301
        %v663 = vunpack.c.h.b16 %v301
        %v664 = vunpack.c.l.b16 %v302
        %v665 = vunpack.c.h.b16 %v302
        %v666 = vunpack.c.l.b16 %v303
        %v667 = vunpack.c.h.b16 %v303
        %v668 = vunpack.c.l.b16 %v304
        %v669 = vunpack.c.h.b16 %v304
        %v670 = vunpack.c.l.b16 %v305
        %v671 = vunpack.c.h.b16 %v305
        %v672 = vunpack.c.l.b16 %v306
        %v673 = vunpack.c.h.b16 %v306
        %v674 = vunpack.c.l.b16 %v307
        %v675 = vunpack.c.h.b16 %v307
        %v676 = vunpack.c.l.b16 %v308
        %v677 = vunpack.c.h.b16 %v308
        %v678 = vunpack.c.l.b16 %v309
        %v679 = vunpack.c.h.b16 %v309
        %v680 = vunpack.c.l.b16 %v310
        %v681 = vunpack.c.h.b16 %v310
        %v682 = vunpack.c.l.b16 %v311
        %v683 = vunpack.c.h.b16 %v311
        %v684 = vunpack.c.l.b16 %v312
        %v685 = vunpack.c.h.b16 %v312
        %v686 = vunpack.c.l.b16 %v313
        %v687 = vunpack.c.h.b16 %v313
        %v688 = vunpack.c.l.b16 %v314
        %v689 = vunpack.c.h.b16 %v314
        %v690 = vunpack.c.l.b16 %v315
        %v691 = vunpack.c.h.b16 %v315
        %v692 = vunpack.c.l.b16 %v316
        %v693 = vunpack.c.h.b16 %v316
        %v694 = vunpack.c.l.b16 %v317
        %v695 = vunpack.c.h.b16 %v317
        %v696 = vunpack.c.l.b16 %v318
        %v697 = vunpack.c.h.b16 %v318
        %v698 = vunpack.c.l.b16 %v319
        %v699 = vunpack.c.h.b16 %v319
        %v700 = vunpack.c.l.b16 %v320
        %v701 = vunpack.c.h.b16 %v320
        %v702 = vunpack.c.l.b16 %v321
        %v703 = vunpack.c.h.b16 %v321
        %v704 = vunpack.c.l.b16 %v322
        %v705 = vunpack.c.h.b16 %v322
        %v706 = vunpack.c.l.b16 %v323
        %v707 = vunpack.c.h.b16 %v323
        %v708 = vunpack.c.l.b16 %v324
        %v709 = vunpack.c.h.b16 %v324
        %v710 = vunpack.c.l.b16 %v325
        %v711 = vunpack.c.h.b16 %v325
        %v712 = vunpack.c.l.b16 %v326
        %v713 = vunpack.c.h.b16 %v326
        %v714 = vunpack.c.l.b16 %v327
        %v715 = vunpack.c.h.b16 %v327
        %v716 = vunpack.c.l.b16 %v328
        %v717 = vunpack.c.h.b16 %v328
        %v718 = vunpack.c.l.b16 %v329
        %v719 = vunpack.c.h.b16 %v329
        %v720 = vunpack.c.l.b16 %v330
        %v721 = vunpack.c.h.b16 %v330
        %v722 = vunpack.c.l.b16 %v331
        %v723 = vunpack.c.h.b16 %v331
        %v724 = vunpack.c.l.b16 %v332
        %v725 = vunpack.c.h.b16 %v332
        %v726 = vunpack.c.l.b16 %v333
        %v727 = vunpack.c.h.b16 %v333
        %v728 = vunpack.c.l.b16 %v334
        %v729 = vunpack.c.h.b16 %v334
        %v730 = vunpack.c.l.b16 %v335
        %v731 = vunpack.c.h.b16 %v335
        %v732 = vunpack.c.l.b16 %v336
        %v733 = vunpack.c.h.b16 %v336
        %v734 = vunpack.c.l.b16 %v337
        %v735 = vunpack.c.h.b16 %v337
        %v736 = vunpack.c.l.b16 %v338
        %v737 = vunpack.c.h.b16 %v338
        %v738 = vunpack.c.l.b16 %v339
        %v739 = vunpack.c.h.b16 %v339
        %v740 = vunpack.c.l.b16 %v340
        %v741 = vunpack.c.h.b16 %v340
        %v742 = vunpack.c.l.b16 %v341
        %v743 = vunpack.c.h.b16 %v341
        %v744 = vunpack.c.l.b16 %v342
        %v745 = vunpack.c.h.b16 %v342
        %v746 = vunpack.c.l.b16 %v343
        %v747 = vunpack.c.h.b16 %v343
        %v748 = vunpack.c.l.b16 %v344
        %v749 = vunpack.c.h.b16 %v344
        %v750 = vunpack.c.l.b16 %v345
        %v751 = vunpack.c.h.b16 %v345
        %v752 = vunpack.c.l.b16 %v346
        %v753 = vunpack.c.h.b16 %v346
        %v754 = vunpack.c.l.b16 %v347
        %v755 = vunpack.c.h.b16 %v347
        %v756 = vunpack.c.l.b16 %v348
        %v757 = vunpack.c.h.b16 %v348
        %v758 = vunpack.c.l.b16 %v349
        %v759 = vunpack.c.h.b16 %v349
        %v760 = vunpack.c.l.b16 %v350
        %v761 = vunpack.c.h.b16 %v350
        %v762 = vunpack.c.l.b16 %v351
        %v763 = vunpack.c.h.b16 %v351
        %v764 = vunpack.c.l.b16 %v352
        %v765 = vunpack.c.h.b16 %v352
        %v766 = vunpack.c.l.b16 %v353
        %v767 = vunpack.c.h.b16 %v353
        %v768 = vunpack.c.l.b16 %v354
        %v769 = vunpack.c.h.b16 %v354
        %v770 = vunpack.c.l.b16 %v355
        %v771 = vunpack.c.h.b16 %v355
        %v772 = vunpack.c.l.b16 %v356
        %v773 = vunpack.c.h.b16 %v356
        %v774 = vunpack.c.l.b16 %v357
        %v775 = vunpack.c.h.b16 %v357
        %v776 = vunpack.c.l.b16 %v358
        %v777 = vunpack.c.h.b16 %v358
        %v778 = vunpack.c.l.b16 %v359
        %v779 = vunpack.c.h.b16 %v359
        %v780 = vunpack.c.l.b16 %v360
        %v781 = vunpack.c.h.b16 %v360
        %v782 = vunpack.c.l.b16 %v361
        %v783 = vunpack.c.h.b16 %v361
        %v784 = vunpack.c.l.b16 %v362
        %v785 = vunpack.c.h.b16 %v362
        %v786 = vunpack.c.l.b16 %v363
        %v787 = vunpack.c.h.b16 %v363
        %v788 = vunpack.c.l.b16 %v364
        %v789 = vunpack.c.h.b16 %v364
        %v790 = vunpack.c.l.b16 %v365
        %v791 = vunpack.c.h.b16 %v365
        %v792 = vunpack.c.l.b16 %v366
        %v793 = vunpack.c.h.b16 %v366
        %v794 = vunpack.c.l.b16 %v367
        %v795 = vunpack.c.h.b16 %v367
        %v796 = vunpack.c.l.b16 %v368
        %v797 = vunpack.c.h.b16 %v368
        %v798 = vunpack.c.l.b16 %v369
        %v799 = vunpack.c.h.b16 %v369
        %v800 = vunpack.c.l.b16 %v370
        %v801 = vunpack.c.h.b16 %v370
        %v802 = vunpack.c.l.b16 %v371
        %v803 = vunpack.c.h.b16 %v371
        %v804 = vunpack.c.l.b16 %v372
        %v805 = vunpack.c.h.b16 %v372
        %v806 = vunpack.c.l.b16 %v373
        %v807 = vunpack.c.h.b16 %v373
        %v808 = vunpack.c.l.b16 %v374
        %v809 = vunpack.c.h.b16 %v374
        %v810 = vunpack.c.l.b16 %v375
        %v811 = vunpack.c.h.b16 %v375
        %v812 = vunpack.c.l.b16 %v376
        %v813 = vunpack.c.h.b16 %v376
        %v814 = vunpack.c.l.b16 %v377
        %v815 = vunpack.c.h.b16 %v377
        %v816 = vunpack.c.l.b16 %v378
        %v817 = vunpack.c.h.b16 %v378
        %v818 = vunpack.c.l.b16 %v379
        %v819 = vunpack.c.h.b16 %v379
        %v820 = vunpack.c.l.b16 %v380
        %v821 = vunpack.c.h.b16 %v380
        %v822 = vunpack.c.l.b16 %v381
        %v823 = vunpack.c.h.b16 %v381
        %v824 = vunpack.c.l.b16 %v382
        %v825 = vunpack.c.h.b16 %v382
        %v826 = vunpack.c.l.b16 %v383
        %v827 = vunpack.c.h.b16 %v383
        %v828 = vunpack.c.l.b16 %v384
        %v829 = vunpack.c.h.b16 %v384
        %v830 = vunpack.c.l.b16 %v385
        %v831 = vunpack.c.h.b16 %v385
        %v832 = vunpack.c.l.b16 %v386
        %v833 = vunpack.c.h.b16 %v386
        %v834 = vunpack.c.l.b16 %v387
        %v835 = vunpack.c.h.b16 %v387
        %v836 = vunpack.c.l.b16 %v388
        %v837 = vunpack.c.h.b16 %v388
        %v838 = vunpack.c.l.b16 %v389
        %v839 = vunpack.c.h.b16 %v389
        %v840 = vunpack.c.l.b16 %v390
        %v841 = vunpack.c.h.b16 %v390
        %v842 = vunpack.c.l.b16 %v391
        %v843 = vunpack.c.h.b16 %v391
        %v844 = vunpack.c.l.b16 %v392
        %v845 = vunpack.c.h.b16 %v392
        %v846 = vunpack.c.l.b16 %v393
        %v847 = vunpack.c.h.b16 %v393
        %v848 = vunpack.c.l.b16 %v394
        %v849 = vunpack.c.h.b16 %v394
        %v850 = vunpack.c.l.b16 %v395
        %v851 = vunpack.c.h.b16 %v395
        %v852 = vunpack.c.l.b16 %v396
        %v853 = vunpack.c.h.b16 %v396
        %v854 = vunpack.c.l.b16 %v397
        %v855 = vunpack.c.h.b16 %v397
        %v856 = vunpack.c.l.b16 %v398
        %v857 = vunpack.c.h.b16 %v398
        %v858 = vunpack.c.l.b16 %v399
        %v859 = vunpack.c.h.b16 %v399
        %v860 = vunpack.c.l.b16 %v400
        %v861 = vunpack.c.h.b16 %v400
        %v862 = vunpack.c.l.b16 %v401
        %v863 = vunpack.c.h.b16 %v401
        %v864 = vunpack.c.l.b16 %v402
        %v865 = vunpack.c.h.b16 %v402
        %v866 = vunpack.c.l.b16 %v403
        %v867 = vunpack.c.h.b16 %v403
        %v868 = vunpack.c.l.b16 %v404
        %v869 = vunpack.c.h.b16 %v404
        %v870 = vunpack.c.l.b16 %v405
        %v871 = vunpack.c.h.b16 %v405
        %v872 = vunpack.c.l.b16 %v406
        %v873 = vunpack.c.h.b16 %v406
        %v874 = vunpack.c.l.b16 %v407
        %v875 = vunpack.c.h.b16 %v407
        %v876 = vunpack.c.l.b16 %v408
        %v877 = vunpack.c.h.b16 %v408
        %v878 = vunpack.c.l.b16 %v409
        %v879 = vunpack.c.h.b16 %v409
        %v880 = vunpack.c.l.b16 %v410
        %v881 = vunpack.c.h.b16 %v410
        %v882 = vunpack.c.l.b16 %v411
        %v883 = vunpack.c.h.b16 %v411
        %v884 = vunpack.c.l.b16 %v412
        %v885 = vunpack.c.h.b16 %v412
        %v886 = vunpack.c.l.b16 %v413
        %v887 = vunpack.c.h.b16 %v413
        %v888 = vunpack.c.l.b16 %v414
        %v889 = vunpack.c.h.b16 %v414
        %v890 = vunpack.c.l.b16 %v415
        %v891 = vunpack.c.h.b16 %v415
        %v892 = vpack.c.b16 %v638, %v636
        %v893 = vpack.c.b16 %v639, %v637
        %v894 = vpack.c.b16 %v642, %v640
        %v895 = vpack.c.b16 %v643, %v641
        %v896 = vpack.c.b16 %v646, %v644
        %v897 = vpack.c.b16 %v647, %v645
        %v898 = vpack.c.b16 %v650, %v648
        %v899 = vpack.c.b16 %v651, %v649
        %v900 = vpack.c.b16 %v654, %v652
        %v901 = vpack.c.b16 %v655, %v653
        %v902 = vpack.c.b16 %v658, %v656
        %v903 = vpack.c.b16 %v659, %v657
        %v904 = vpack.c.b16 %v662, %v660
        %v905 = vpack.c.b16 %v663, %v661
        %v906 = vpack.c.b16 %v666, %v664
        %v907 = vpack.c.b16 %v667, %v665
        %v908 = vpack.c.b16 %v670, %v668
        %v909 = vpack.c.b16 %v671, %v669
        %v910 = vpack.c.b16 %v674, %v672
        %v911 = vpack.c.b16 %v675, %v673
        %v912 = vpack.c.b16 %v678, %v676
        %v913 = vpack.c.b16 %v679, %v677
        %v914 = vpack.c.b16 %v682, %v680
        %v915 = vpack.c.b16 %v683, %v681
        %v916 = vpack.c.b16 %v686, %v684
        %v917 = vpack.c.b16 %v687, %v685
        %v918 = vpack.c.b16 %v690, %v688
        %v919 = vpack.c.b16 %v691, %v689
        %v920 = vpack.c.b16 %v694, %v692
        %v921 = vpack.c.b16 %v695, %v693
        %v922 = vpack.c.b16 %v698, %v696
        %v923 = vpack.c.b16 %v699, %v697
        %v924 = vpack.c.b16 %v702, %v700
        %v925 = vpack.c.b16 %v703, %v701
        %v926 = vpack.c.b16 %v706, %v704
        %v927 = vpack.c.b16 %v707, %v705
        %v928 = vpack.c.b16 %v710, %v708
        %v929 = vpack.c.b16 %v711, %v709
        %v930 = vpack.c.b16 %v714, %v712
        %v931 = vpack.c.b16 %v715, %v713
        %v932 = vpack.c.b16 %v718, %v716
        %v933 = vpack.c.b16 %v719, %v717
        %v934 = vpack.c.b16 %v722, %v720
        %v935 = vpack.c.b16 %v723, %v721
        %v936 = vpack.c.b16 %v726, %v724
        %v937 = vpack.c.b16 %v727, %v725
        %v938 = vpack.c.b16 %v730, %v728
        %v939 = vpack.c.b16 %v731, %v729
        %v940 = vpack.c.b16 %v734, %v732
        %v941 = vpack.c.b16 %v735, %v733
        %v942 = vpack.c.b16 %v738, %v736
        %v943 = vpack.c.b16 %v739, %v737
        %v944 = vpack.c.b16 %v742, %v740
        %v945 = vpack.c.b16 %v743, %v741
        %v946 = vpack.c.b16 %v746, %v744
        %v947 = vpack.c.b16 %v747, %v745
        %v948 = vpack.c.b16 %v750, %v748
        %v949 = vpack.c.b16 %v751, %v749
        %v950 = vpack.c.b16 %v754, %v752
        %v951 = vpack.c.b16 %v755, %v753
        %v952 = vpack.c.b16 %v758, %v756
        %v953 = vpack.c.b16 %v759, %v757
        %v954 = vpack.c.b16 %v762, %v760
        %v955 = vpack.c.b16 %v763, %v761
        %v956 = vpack.c.b16 %v766, %v764
        %v957 = vpack.c.b16 %v767, %v765
        %v958 = vpack.c.b16 %v770, %v768
        %v959 = vpack.c.b16 %v771, %v769
        %v960 = vpack.c.b16 %v774, %v772
        %v961 = vpack.c.b16 %v775, %v773
        %v962 = vpack.c.b16 %v778, %v776
        %v963 = vpack.c.b16 %v779, %v777
        %v964 = vpack.c.b16 %v782, %v780
        %v965 = vpack.c.b16 %v783, %v781
        %v966 = vpack.c.b16 %v786, %v784
        %v967 = vpack.c.b16 %v787, %v785
        %v968 = vpack.c.b16 %v790, %v788
        %v969 = vpack.c.b16 %v791, %v789
        %v970 = vpack.c.b16 %v794, %v792
        %v971 = vpack.c.b16 %v795, %v793
        %v972 = vpack.c.b16 %v798, %v796
        %v973 = vpack.c.b16 %v799, %v797
        %v974 = vpack.c.b16 %v802, %v800
        %v975 = vpack.c.b16 %v803, %v801
        %v976 = vpack.c.b16 %v806, %v804
        %v977 = vpack.c.b16 %v807, %v805
        %v978 = vpack.c.b16 %v810, %v808
        %v979 = vpack.c.b16 %v811, %v809
        %v980 = vpack.c.b16 %v814, %v812
        %v981 = vpack.c.b16 %v815, %v813
        %v982 = vpack.c.b16 %v818, %v816
        %v983 = vpack.c.b16 %v819, %v817
        %v984 = vpack.c.b16 %v822, %v820
        %v985 = vpack.c.b16 %v823, %v821
        %v986 = vpack.c.b16 %v826, %v824
        %v987 = vpack.c.b16 %v827, %v825
        %v988 = vpack.c.b16 %v830, %v828
        %v989 = vpack.c.b16 %v831, %v829
        %v990 = vpack.c.b16 %v834, %v832
        %v991 = vpack.c.b16 %v835, %v833
        %v992 = vpack.c.b16 %v838, %v836
        %v993 = vpack.c.b16 %v839, %v837
        %v994 = vpack.c.b16 %v842, %v840
        %v995 = vpack.c.b16 %v843, %v841
        %v996 = vpack.c.b16 %v846, %v844
        %v997 = vpack.c.b16 %v847, %v845
        %v998 = vpack.c.b16 %v850, %v848
        %v999 = vpack.c.b16 %v851, %v849
        %v1000 = vpack.c.b16 %v854, %v852
        %v1001 = vpack.c.b16 %v855, %v853
        %v1002 = vpack.c.b16 %v858, %v856
        %v1003 = vpack.c.b16 %v859, %v857
        %v1004 = vpack.c.b16 %v862, %v860
        %v1005 = vpack.c.b16 %v863, %v861
        %v1006 = vpack.c.b16 %v866, %v864
        %v1007 = vpack.c.b16 %v867, %v865
        %v1008 = vpack.c.b16 %v870, %v868
        %v1009 = vpack.c.b16 %v871, %v869
        %v1010 = vpack.c.b16 %v874, %v872
        %v1011 = vpack.c.b16 %v875, %v873
        %v1012 = vpack.c.b16 %v878, %v876
        %v1013 = vpack.c.b16 %v879, %v877
        %v1014 = vpack.c.b16 %v882, %v880
        %v1015 = vpack.c.b16 %v883, %v881
        %v1016 = vpack.c.b16 %v886, %v884
        %v1017 = vpack.c.b16 %v887, %v885
        %v1018 = vpack.c.b16 %v890, %v888
        %v1019 = vpack.c.b16 %v891, %v889
        %1148 = vmatprep.subr.bf16.mxu0 %v893
        %1149 = vmatpush1.bf16.msra.mxu0 %v892
        %1150 = vmatprep.subr.bf16.mxu0 %v895
        %1151 = vmatpush1.bf16.msra.mxu0 %v894
        %1152 = vmatprep.subr.bf16.mxu0 %v897
        %1153 = vmatpush1.bf16.msra.mxu0 %v896
        %1154 = vmatprep.subr.bf16.mxu0 %v899
        %1155 = vmatpush1.bf16.msra.mxu0 %v898
        %1156 = vmatprep.subr.bf16.mxu0 %v901
        %1157 = vmatpush1.bf16.msra.mxu0 %v900
        %1158 = vmatprep.subr.bf16.mxu0 %v903
        %1159 = vmatpush1.bf16.msra.mxu0 %v902
        %1160 = vmatprep.subr.bf16.mxu0 %v905
        %1161 = vmatpush1.bf16.msra.mxu0 %v904
        %1162 = vmatprep.subr.bf16.mxu0 %v907
        %1163 = vmatpush1.bf16.msra.mxu0 %v906
        %1164 = vmatprep.subr.bf16.mxu0 %v909
        %1165 = vmatpush1.bf16.msra.mxu0 %v908
        %1166 = vmatprep.subr.bf16.mxu0 %v911
        %1167 = vmatpush1.bf16.msra.mxu0 %v910
        %1168 = vmatprep.subr.bf16.mxu0 %v913
        %1169 = vmatpush1.bf16.msra.mxu0 %v912
        %1170 = vmatprep.subr.bf16.mxu0 %v915
        %1171 = vmatpush1.bf16.msra.mxu0 %v914
        %1172 = vmatprep.subr.bf16.mxu0 %v917
        %1173 = vmatpush1.bf16.msra.mxu0 %v916
        %1174 = vmatprep.subr.bf16.mxu0 %v919
        %1175 = vmatpush1.bf16.msra.mxu0 %v918
        %1176 = vmatprep.subr.bf16.mxu0 %v921
        %1177 = vmatpush1.bf16.msra.mxu0 %v920
        %1178 = vmatprep.subr.bf16.mxu0 %v923
        %1179 = vmatpush1.bf16.msra.mxu0 %v922
        %1180 = vmatprep.mubr.bf16.mxu0 %v477
        %1181 = vmatmul.mubr.bf16.gmra.mrb[0].mxu0 %v476
        %v1182 = vpop.f32.mrb[0].mxu0
        %v1183 = vadd.f32 %v421, %v1182
        %v1184 = vpop.f32.mrb[0].mxu0
        %v1185 = vadd.f32 %v425, %v1184
        %v1186 = vpop.f32.mrb[0].mxu0
        %v1187 = vadd.f32 %v421, %v1186
        %v1188 = vpop.f32.mrb[0].mxu0
        %v1189 = vadd.f32 %v425, %v1188
        %1190 = vmatprep.mubr.bf16.mxu0 %v485
        %1191 = vmatmul.mubr.bf16.gmra.mrb[0].mxu0 %v484
        %v1192 = vpop.f32.mrb[0].mxu0
        %v1193 = vadd.f32 %v421, %v1192
        %v1194 = vpop.f32.mrb[0].mxu0
        %v1195 = vadd.f32 %v425, %v1194
        %v1196 = vpop.f32.mrb[0].mxu0
        %v1197 = vadd.f32 %v421, %v1196
        %v1198 = vpop.f32.mrb[0].mxu0
        %v1199 = vadd.f32 %v425, %v1198
        %1200 = vdwg.mxu0
        %1201 = vmatprep.subr.bf16.mxu0 %v925
        %1202 = vmatpush1.bf16.msra.mxu0 %v924
        %1203 = vmatprep.subr.bf16.mxu0 %v927
        %1204 = vmatpush1.bf16.msra.mxu0 %v926
        %1205 = vmatprep.subr.bf16.mxu0 %v929
        %1206 = vmatpush1.bf16.msra.mxu0 %v928
        %1207 = vmatprep.subr.bf16.mxu0 %v931
        %1208 = vmatpush1.bf16.msra.mxu0 %v930
        %1209 = vmatprep.subr.bf16.mxu0 %v933
        %1210 = vmatpush1.bf16.msra.mxu0 %v932
        %1211 = vmatprep.subr.bf16.mxu0 %v935
        %1212 = vmatpush1.bf16.msra.mxu0 %v934
        %1213 = vmatprep.subr.bf16.mxu0 %v937
        %1214 = vmatpush1.bf16.msra.mxu0 %v936
        %1215 = vmatprep.subr.bf16.mxu0 %v939
        %1216 = vmatpush1.bf16.msra.mxu0 %v938
        %1217 = vmatprep.subr.bf16.mxu0 %v941
        %1218 = vmatpush1.bf16.msra.mxu0 %v940
        %1219 = vmatprep.subr.bf16.mxu0 %v943
        %1220 = vmatpush1.bf16.msra.mxu0 %v942
        %1221 = vmatprep.subr.bf16.mxu0 %v945
        %1222 = vmatpush1.bf16.msra.mxu0 %v944
        %1223 = vmatprep.subr.bf16.mxu0 %v947
        %1224 = vmatpush1.bf16.msra.mxu0 %v946
        %1225 = vmatprep.subr.bf16.mxu0 %v949
        %1226 = vmatpush1.bf16.msra.mxu0 %v948
        %1227 = vmatprep.subr.bf16.mxu0 %v951
        %1228 = vmatpush1.bf16.msra.mxu0 %v950
        %1229 = vmatprep.subr.bf16.mxu0 %v953
        %1230 = vmatpush1.bf16.msra.mxu0 %v952
        %1231 = vmatprep.subr.bf16.mxu0 %v955
        %1232 = vmatpush1.bf16.msra.mxu0 %v954
        %1233 = vmatprep.mubr.bf16.mxu0 %v479
        %1234 = vmatmul.mubr.bf16.gmra.mrb[0].mxu0 %v478
        %v1235 = vpop.f32.mrb[0].mxu0
        %v1236 = vadd.f32 %v1183, %v1235
        %v1237 = vpop.f32.mrb[0].mxu0
        %v1238 = vadd.f32 %v1185, %v1237
        %v1239 = vpop.f32.mrb[0].mxu0
        %v1240 = vadd.f32 %v1187, %v1239
        %v1241 = vpop.f32.mrb[0].mxu0
        %v1242 = vadd.f32 %v1189, %v1241
        %1243 = vmatprep.mubr.bf16.mxu0 %v487
        %1244 = vmatmul.mubr.bf16.gmra.mrb[0].mxu0 %v486
        %v1245 = vpop.f32.mrb[0].mxu0
        %v1246 = vadd.f32 %v1193, %v1245
        %v1247 = vpop.f32.mrb[0].mxu0
        %v1248 = vadd.f32 %v1195, %v1247
        %v1249 = vpop.f32.mrb[0].mxu0
        %v1250 = vadd.f32 %v1197, %v1249
        %v1251 = vpop.f32.mrb[0].mxu0
        %v1252 = vadd.f32 %v1199, %v1251
        %1253 = vdwg.mxu0
        %1254 = vmatprep.subr.bf16.mxu0 %v957
        %1255 = vmatpush1.bf16.msra.mxu0 %v956
        %1256 = vmatprep.subr.bf16.mxu0 %v959
        %1257 = vmatpush1.bf16.msra.mxu0 %v958
        %1258 = vmatprep.subr.bf16.mxu0 %v961
        %1259 = vmatpush1.bf16.msra.mxu0 %v960
        %1260 = vmatprep.subr.bf16.mxu0 %v963
        %1261 = vmatpush1.bf16.msra.mxu0 %v962
        %1262 = vmatprep.subr.bf16.mxu0 %v965
        %1263 = vmatpush1.bf16.msra.mxu0 %v964
        %1264 = vmatprep.subr.bf16.mxu0 %v967
        %1265 = vmatpush1.bf16.msra.mxu0 %v966
        %1266 = vmatprep.subr.bf16.mxu0 %v969
        %1267 = vmatpush1.bf16.msra.mxu0 %v968
        %1268 = vmatprep.subr.bf16.mxu0 %v971
        %1269 = vmatpush1.bf16.msra.mxu0 %v970
        %1270 = vmatprep.subr.bf16.mxu0 %v973
        %1271 = vmatpush1.bf16.msra.mxu0 %v972
        %1272 = vmatprep.subr.bf16.mxu0 %v975
        %1273 = vmatpush1.bf16.msra.mxu0 %v974
        %1274 = vmatprep.subr.bf16.mxu0 %v977
        %1275 = vmatpush1.bf16.msra.mxu0 %v976
        %1276 = vmatprep.subr.bf16.mxu0 %v979
        %1277 = vmatpush1.bf16.msra.mxu0 %v978
        %1278 = vmatprep.subr.bf16.mxu0 %v981
        %1279 = vmatpush1.bf16.msra.mxu0 %v980
        %1280 = vmatprep.subr.bf16.mxu0 %v983
        %1281 = vmatpush1.bf16.msra.mxu0 %v982
        %1282 = vmatprep.subr.bf16.mxu0 %v985
        %1283 = vmatpush1.bf16.msra.mxu0 %v984
        %1284 = vmatprep.subr.bf16.mxu0 %v987
        %1285 = vmatpush1.bf16.msra.mxu0 %v986
        %1286 = vmatprep.mubr.bf16.mxu0 %v481
        %1287 = vmatmul.mubr.bf16.gmra.mrb[0].mxu0 %v480
        %v1288 = vpop.f32.mrb[0].mxu0
        %v1289 = vadd.f32 %v1236, %v1288
        %v1290 = vpop.f32.mrb[0].mxu0
        %v1291 = vadd.f32 %v1238, %v1290
        %v1292 = vpop.f32.mrb[0].mxu0
        %v1293 = vadd.f32 %v1240, %v1292
        %v1294 = vpop.f32.mrb[0].mxu0
        %v1295 = vadd.f32 %v1242, %v1294
        %1296 = vmatprep.mubr.bf16.mxu0 %v489
        %1297 = vmatmul.mubr.bf16.gmra.mrb[0].mxu0 %v488
        %v1298 = vpop.f32.mrb[0].mxu0
        %v1299 = vadd.f32 %v1246, %v1298
        %v1300 = vpop.f32.mrb[0].mxu0
        %v1301 = vadd.f32 %v1248, %v1300
        %v1302 = vpop.f32.mrb[0].mxu0
        %v1303 = vadd.f32 %v1250, %v1302
        %v1304 = vpop.f32.mrb[0].mxu0
        %v1305 = vadd.f32 %v1252, %v1304
        %1306 = vdwg.mxu0
        %1307 = vmatprep.subr.bf16.mxu0 %v989
        %1308 = vmatpush1.bf16.msra.mxu0 %v988
        %1309 = vmatprep.subr.bf16.mxu0 %v991
        %1310 = vmatpush1.bf16.msra.mxu0 %v990
        %1311 = vmatprep.subr.bf16.mxu0 %v993
        %1312 = vmatpush1.bf16.msra.mxu0 %v992
        %1313 = vmatprep.subr.bf16.mxu0 %v995
        %1314 = vmatpush1.bf16.msra.mxu0 %v994
        %1315 = vmatprep.subr.bf16.mxu0 %v997
        %1316 = vmatpush1.bf16.msra.mxu0 %v996
        %1317 = vmatprep.subr.bf16.mxu0 %v999
        %1318 = vmatpush1.bf16.msra.mxu0 %v998
        %1319 = vmatprep.subr.bf16.mxu0 %v1001
        %1320 = vmatpush1.bf16.msra.mxu0 %v1000
        %1321 = vmatprep.subr.bf16.mxu0 %v1003
        %1322 = vmatpush1.bf16.msra.mxu0 %v1002
        %1323 = vmatprep.subr.bf16.mxu0 %v1005
        %1324 = vmatpush1.bf16.msra.mxu0 %v1004
        %1325 = vmatprep.subr.bf16.mxu0 %v1007
        %1326 = vmatpush1.bf16.msra.mxu0 %v1006
        %1327 = vmatprep.subr.bf16.mxu0 %v1009
        %1328 = vmatpush1.bf16.msra.mxu0 %v1008
        %1329 = vmatprep.subr.bf16.mxu0 %v1011
        %1330 = vmatpush1.bf16.msra.mxu0 %v1010
        %1331 = vmatprep.subr.bf16.mxu0 %v1013
        %1332 = vmatpush1.bf16.msra.mxu0 %v1012
        %1333 = vmatprep.subr.bf16.mxu0 %v1015
        %1334 = vmatpush1.bf16.msra.mxu0 %v1014
        %1335 = vmatprep.subr.bf16.mxu0 %v1017
        %1336 = vmatpush1.bf16.msra.mxu0 %v1016
        %1337 = vmatprep.subr.bf16.mxu0 %v1019
        %1338 = vmatpush1.bf16.msra.mxu0 %v1018
        %1339 = vmatprep.mubr.bf16.mxu0 %v483
        %1340 = vmatmul.mubr.bf16.gmra.mrb[0].mxu0 %v482
        %v1341 = vpop.f32.mrb[0].mxu0
        %v1342 = vadd.f32 %v1289, %v1341
        %v1343 = vpop.f32.mrb[0].mxu0
        %v1344 = vadd.f32 %v1291, %v1343
        %v1345 = vpop.f32.mrb[0].mxu0
        %v1346 = vadd.f32 %v1293, %v1345
        %v1347 = vpop.f32.mrb[0].mxu0
        %v1348 = vadd.f32 %v1295, %v1347
        %1349 = vmatprep.mubr.bf16.mxu0 %v491
        %1350 = vmatmul.mubr.bf16.gmra.mrb[0].mxu0 %v490
        %v1351 = vpop.f32.mrb[0].mxu0
        %v1352 = vadd.f32 %v1299, %v1351
        %v1353 = vpop.f32.mrb[0].mxu0
        %v1354 = vadd.f32 %v1301, %v1353
        %v1355 = vpop.f32.mrb[0].mxu0
        %v1356 = vadd.f32 %v1303, %v1355
        %v1357 = vpop.f32.mrb[0].mxu0
        %v1358 = vadd.f32 %v1305, %v1357
        %1359 = vdwg.mxu0
        %v1360 = vpack.c.bf16 %v1346, %v1342
        %v1361 = vpack.c.bf16 %v1348, %v1344
        %v1362 = vpack.c.bf16 %v1356, %v1352
        %v1363 = vpack.c.bf16 %v1358, %v1354
        %v1368 = vunpack.c.l.b16 %v1360
        %v1369 = vunpack.c.l.b16 %v1361
        %v1370 = vunpack.c.h.b16 %v1360
        %v1371 = vunpack.c.h.b16 %v1361
        %v1372 = vunpack.c.l.b16 %v1362
        %v1373 = vunpack.c.l.b16 %v1363
        %v1374 = vunpack.c.h.b16 %v1362
        %v1375 = vunpack.c.h.b16 %v1363
        %v1376 = vpack.c.b16 %v1369, %v1368
        %v1377 = vpack.c.b16 %v1371, %v1370
        %v1378 = vpack.c.b16 %v1373, %v1372
        %v1379 = vpack.c.b16 %v1375, %v1374
        %1384 = vst [vmem:[%s270] sm:$0xff] %v1376
        %1385 = vst [vmem:[%s270 + $0x8] sm:$0xff] %v1377
        %1386 = vst [vmem:[%s270 + $0x10] sm:$0xff] %v1378
        %1387 = vst [vmem:[%s270 + $0x18] sm:$0xff] %v1379
        %s1388 = smul.u32 4, %s27
        %p1389 = scmp.lt.s32.totalorder %s1388, 15
        %s1390 = scalar_select %p1389, %s1388, 15
        %s1391 = smul.addr %s1390, 2
        %s1392 = smul.addr %s1391, 4
        %s1393 = scalar_lea.vmem %s4, %s1392
        // Predicated region
        $region41: #{_forward.1} parent=31 // pred_check
          %p1394 = pneg %p127
        $region42: #{_forward.1} parent=31 // pred_check_branch
          %1396 = sbr.rel (%p1394) target = $region44
        $region43: #{_forward.1} parent=31 // pred_region
          %s1397 = smul.u32 4, %s27
        $region44: #{_forward.1} parent=31 // pred_fallthru
          _
      $region32: #{_forward.1} parent=5 // pred_fallthru
        _
      %p1398 = scmp.le.s32.totalorder 2, %s22
      // Predicated region
      $region45: #{_forward.1} parent=5 // pred_check
        %p1399 = pneg %p1398
      $region46: #{_forward.1} parent=5 // pred_check_branch
        %1401 = sbr.rel (%p1399) target = $region48
      $region47: #{_forward.1} parent=5 // pred_region
        %s1402 = ssub.s32 %s22, 2
        // Predicated region
        $region49: #{_forward.1} parent=47 // pred_check
          %p1403 = pneg %p133
        $region50: #{_forward.1} parent=47 // pred_check_branch
          %1405 = sbr.rel (%p1403) target = $region52
        $region51: #{_forward.1} parent=47 // pred_region
          %s1406 = smul.u32 4, %s28
          %p1407 = scmp.lt.s32.totalorder %s1406, 15
          %s1408 = scalar_select %p1407, %s1406, 15
          %s1409 = smul.addr %s1408, 2
          %s1410 = smul.addr %s1409, 4
          %s1411 = scalar_lea.vmem %s4, %s1410
        $region52: #{_forward.1} parent=47 // pred_fallthru
          _
      $region48: #{_forward.1} parent=5 // pred_fallthru
        _
    $region6: #{_forward.1} parent=1 // loop_footer
      %s26 = sadd.s32 1, %s22
    $region7: #{_forward.1} parent=1 // loop_footer_branch
      %21 = sbr.rel target = $region3
    $region8: #{_forward.1} parent=1 // loop_exit
      _
    %1412 = vsyncpa [#allocation5], 1
    %s1413 = scalar_lea.sflag [#allocation5], 1
    %1414 = vsyncpa %s1413, 1
    %1415 = vsyncpa [#allocation7], 1
    %s1416 = scalar_lea.sflag [#allocation7], 1
    %1417 = vsyncpa %s1416, 1

</llo_original>
